<compile_context>
chip_gen: v5e
topology: v5e:2x2
jax: 0.10.0
libtpu: 0.0.40
codegen_flags: <defaults>
</compile_context>

<pallas_src>
import jax
import jax.numpy as jnp
from jax.experimental import pallas as pl
from jax.experimental.pallas import tpu as pltpu

LANE = 128
SUBLANE = 8
MAX_BLOCK_ROWS = 2048  # (2, 2048, 128) f32 = 2 MiB per pipelined buffer


def _round_up(a, b):
    return ((a + b - 1) // b) * b


def _nonlinear_kernel(thr_ref, x_ref, y_ref):
    # x_ref / y_ref: (2, BLOCK_ROWS, 128) float32; plane 0 = Re(x), plane 1 = Im(x).
    thr = thr_ref[0]                       # scalar threshold from SMEM
    xr = x_ref[0]
    xi = x_ref[1]
    intensity = xr * xr + xi * xi          # |x|^2
    mask = jax.nn.sigmoid((intensity - thr) * 10.0)
    y_ref[0] = xr * mask
    y_ref[1] = xi * mask


def nonlinear_layer(x, threshold):
    """Apply the optical threshold nonlinearity.

    x:         complex64 array (NCHW or any shape; op is elementwise)
    threshold: float32 array of shape (1,)  (the nn.Parameter)
    """
    orig_shape = x.shape
    n = x.size

    # real/imag of complex64 are already f32 (no astype); stack into one slab.
    planes = jnp.stack([jnp.real(x).reshape(-1), jnp.imag(x).reshape(-1)])  # (2, n)

    rows_needed = pl.cdiv(n, LANE)
    # Large blocks (mem-bound op), but aim for >=2 grid steps when possible so
    # v7x's two TensorCores both get work; cap at MAX_BLOCK_ROWS for VMEM.
    block_rows = min(
        MAX_BLOCK_ROWS,
        max(SUBLANE, _round_up(pl.cdiv(rows_needed, 2), SUBLANE)),
    )
    rows = _round_up(rows_needed, block_rows)
    padded = rows * LANE
    if padded != n:
        planes = jnp.pad(planes, ((0, 0), (0, padded - n)))
    planes = planes.reshape(2, rows, LANE)

    block_spec = pl.BlockSpec((2, block_rows, LANE), lambda i: (0, i, 0))
    grid = (rows // block_rows,)

    out = pl.pallas_call(
        _nonlinear_kernel,
        out_shape=jax.ShapeDtypeStruct((2, rows, LANE), jnp.float32),
        grid_spec=pltpu.PrefetchScalarGridSpec(
            num_scalar_prefetch=0,
            grid=grid,
            in_specs=[
                pl.BlockSpec(memory_space=pltpu.SMEM),  # threshold scalar
                block_spec,                             # stacked re/im planes
            ],
            out_specs=block_spec,
        ),
        compiler_params=pltpu.CompilerParams(
            dimension_semantics=("parallel",),
        ),
        cost_estimate=pl.CostEstimate(
            flops=7 * n, transcendentals=n, bytes_accessed=16 * n,
        ),
    )(jnp.asarray(threshold, jnp.float32), planes)

    out = out.reshape(2, padded)[:, :n]
    y = jax.lax.complex(out[0], out[1]).reshape(orig_shape)
    return y.astype(jnp.complex64)


def _reference(x, threshold):
    intensity = jnp.abs(x) ** 2
    mask = jax.nn.sigmoid((intensity - threshold[0]) * 10.0)
    return (x * mask).astype(jnp.complex64)


if __name__ == "__main__":
    key = jax.random.PRNGKey(0)
    k_re, k_im = jax.random.split(key)

    # Small NCHW optical field: batch=2, channels=4, spatial=16x16.
    shape = (2, 4, 16, 16)
    x = (jax.random.normal(k_re, shape, dtype=jnp.float32)
         + 1j * jax.random.normal(k_im, shape, dtype=jnp.float32)).astype(jnp.complex64)

    # Deterministic parameter init: threshold_init = 0.5 (as in __init__).
    threshold = jnp.array([0.5], dtype=jnp.float32)

    out = jax.block_until_ready(nonlinear_layer(x, threshold))

    ref = _reference(x, threshold)
    assert out.shape == shape and out.dtype == jnp.complex64
    assert jnp.allclose(out, ref, atol=1e-5, rtol=1e-5)

    print("KERNEL_OK")
</pallas_src>

<mosaic_0001>
module attributes {stable_mosaic.version = 11 : i64} {
  func.func @_nonlinear_kernel(%arg0: i32, %arg1: memref<1xf32, #tpu.memory_space<smem>>, %arg2: memref<2x8x128xf32, #tpu.memory_space<vmem>>, %arg3: memref<2x8x128xf32, #tpu.memory_space<vmem>>) attributes {dimension_semantics = [#tpu.dimension_semantics<parallel>], iteration_bounds = array<i64: 2>, scalar_prefetch = 0 : i64, scratch_operands = 0 : i64, tpu.core_type = #tpu.core_type<tc>, window_params = [{transform_indices = @transform_0, window_bounds = array<i64: 1>}, {transform_indices = @transform_1, window_bounds = array<i64: 2, 8, 128>}, {transform_indices = @transform_2, window_bounds = array<i64: 2, 8, 128>}]} {
    %c0 = arith.constant 0 : index
    %0 = memref.load %arg1[%c0] : memref<1xf32, #tpu.memory_space<smem>>
    %c0_0 = arith.constant 0 : index
    %c0_1 = arith.constant 0 : index
    %c0_2 = arith.constant 0 : index
    %1 = vector.load %arg2[%c0_0, %c0_1, %c0_2] : memref<2x8x128xf32, #tpu.memory_space<vmem>>, vector<1x8x128xf32>
    %2 = vector.shape_cast %1 : vector<1x8x128xf32> to vector<8x128xf32>
    %c1 = arith.constant 1 : index
    %c0_3 = arith.constant 0 : index
    %c0_4 = arith.constant 0 : index
    %3 = vector.load %arg2[%c1, %c0_3, %c0_4] : memref<2x8x128xf32, #tpu.memory_space<vmem>>, vector<1x8x128xf32>
    %4 = vector.shape_cast %3 : vector<1x8x128xf32> to vector<8x128xf32>
    %5 = arith.mulf %2, %2 : vector<8x128xf32>
    %6 = arith.mulf %4, %4 : vector<8x128xf32>
    %7 = arith.addf %5, %6 : vector<8x128xf32>
    %8 = vector.broadcast %0 : f32 to vector<8x128xf32>
    %9 = arith.subf %7, %8 : vector<8x128xf32>
    %cst = arith.constant 1.000000e+01 : f32
    %10 = vector.broadcast %cst : f32 to vector<8x128xf32>
    %11 = arith.mulf %9, %10 : vector<8x128xf32>
    %12 = arith.negf %11 : vector<8x128xf32>
    %13 = math.exp %12 : vector<8x128xf32>
    %cst_5 = arith.constant 1.000000e+00 : f32
    %14 = vector.broadcast %cst_5 : f32 to vector<8x128xf32>
    %15 = arith.addf %14, %13 : vector<8x128xf32>
    %16 = arith.divf %14, %15 : vector<8x128xf32>
    %17 = arith.mulf %2, %16 : vector<8x128xf32>
    %c0_6 = arith.constant 0 : index
    %c0_7 = arith.constant 0 : index
    %c0_8 = arith.constant 0 : index
    %18 = vector.load %arg3[%c0_6, %c0_7, %c0_8] : memref<2x8x128xf32, #tpu.memory_space<vmem>>, vector<1x8x128xf32>
    %19 = vector.shape_cast %18 : vector<1x8x128xf32> to vector<8x128xf32>
    %20 = vector.shape_cast %17 : vector<8x128xf32> to vector<1x8x128xf32>
    tpu.vector_store %arg3[%c0_6, %c0_7, %c0_8], %20 {strides = array<i32>} : memref<2x8x128xf32, #tpu.memory_space<vmem>>, vector<1x8x128xf32>,
    %21 = arith.mulf %4, %16 : vector<8x128xf32>
    %c1_9 = arith.constant 1 : index
    %c0_10 = arith.constant 0 : index
    %c0_11 = arith.constant 0 : index
    %22 = vector.load %arg3[%c1_9, %c0_10, %c0_11] : memref<2x8x128xf32, #tpu.memory_space<vmem>>, vector<1x8x128xf32>
    %23 = vector.shape_cast %22 : vector<1x8x128xf32> to vector<8x128xf32>
    %24 = vector.shape_cast %21 : vector<8x128xf32> to vector<1x8x128xf32>
    tpu.vector_store %arg3[%c1_9, %c0_10, %c0_11], %24 {strides = array<i32>} : memref<2x8x128xf32, #tpu.memory_space<vmem>>, vector<1x8x128xf32>,
    return
  }
  func.func @transform_0(%arg0: i32) -> i32 {
    %c0_i32 = arith.constant 0 : i32
    %c0_i32_0 = arith.constant 0 : i32
    return %c0_i32 : i32
  }
  func.func @transform_1(%arg0: i32) -> (i32, i32, i32) {
    %c0_i32 = arith.constant 0 : i32
    %c0_i32_0 = arith.constant 0 : i32
    %c0_i32_1 = arith.constant 0 : i32
    return %c0_i32, %arg0, %c0_i32_0 : i32, i32, i32
  }
  func.func @transform_2(%arg0: i32) -> (i32, i32, i32) {
    %c0_i32 = arith.constant 0 : i32
    %c0_i32_0 = arith.constant 0 : i32
    %c0_i32_1 = arith.constant 0 : i32
    return %c0_i32, %arg0, %c0_i32_0 : i32, i32, i32
  }
}

</mosaic_0001>

<llo_original>
// kernel: tpu_custom_call.1
$region0: #{tpu_custom_call.1}
  #allocation0 [shape = 'u32[]', space=smem, size = 0x4, offset = 0x4, fixed_abs, tag = 'smem constant byte address 0x4 - core index']
  #allocation1 [shape = 'u32[72,128]{1,0:T(1,128)}', space=vmem, size = 0x9000, scoped, tag = 'internal scratch']
  #allocation2 [shape = 'f32[1]{0:T(128)S(6)}', space=smem, size = 0x200, scoped, tag = 'scoped memory for tpu_custom_call.1']
  %s0 = inlined_call_operand.<no memory space> [shape: f32[1], index: 0, kind: input, shape index: {}]
  %s1 = inlined_call_operand.hbm [shape: f32[2,16,128], index: 1, kind: input, shape index: {}]
  %s2 = inlined_call_operand.hbm [shape: f32[2,16,128], index: 2, kind: output, shape index: {}]
  %s3 = sld [smem:[#allocation0]]
  $region45: #{tpu_custom_call.1} parent=0
    _
  %s5 = ssub.s32 1, %s3
  %s6 = scalar_select 0, %s5, %s3
  %7 = sst [smem:[#allocation2]] %s0
  $region1: #{tpu_custom_call.1} parent=0
    #allocation3 [shape = 'u8[16384]{0}', space=vmem, size = 0x4000, scoped, tag = 'input window, operand 1']
    #allocation4 [shape = 's32[2]{0}', space=sflag, size = 0x8, scoped, tag = 'scoped memory for tpu_custom_call.1']
    #allocation5 [shape = 's32[2]{0}', space=sflag, size = 0x8, scoped, tag = 'scoped memory for tpu_custom_call.1']
    #allocation6 [shape = 'u8[16384]{0}', space=vmem, size = 0x4000, scoped, tag = 'output window, operand 0']
    %8 = vsyncpa [#allocation4], 0
    %s9 = scalar_lea.sflag [#allocation4], 1
    %10 = vsyncpa %s9, 0
    %11 = vsyncpa [#allocation5], 0
    %s12 = scalar_lea.sflag [#allocation5], 1
    %13 = vsyncpa %s12, 0
    loop: start=0, step=1, limit=4
    $region2: #{tpu_custom_call.1} parent=1 // loop_pre_header
      _
    $region3: #{tpu_custom_call.1} parent=1 // loop_header
      %s15 = sphi 0, %s19
      %p16 = scmp.ge.s32.totalorder %s15, 4
      %s23 = sphi 0, %s23
      %s25 = sphi 0, %s23
      %s26 = sphi 0, %s25
      %s40 = sphi 0, %s26
      %s46 = sphi 0, %s48
      %s49 = sphi 0, %s46
      %s50 = sphi 0, %s49
      %s66 = sphi 0, %s50
      %s72 = sphi 0, %s74
      %s75 = sphi 0, %s72
      %s76 = sphi 0, %s75
      %s92 = sphi 0, %s76
    $region4: #{tpu_custom_call.1} parent=1 // loop_header_branch
      %18 = sbr.rel (%p16) target = $region8
    $region5: #{tpu_custom_call.1} parent=1 // loop_body
      %s20 = ssub.s32 %s15, 1
      %s21 = ssub.s32 %s15, 2
      %s22 = sadd.s32 %s15, 1
      %s24 = sadd.s32 %s23, 1
      %p27 = scmp.eq.s32.totalorder %s15, 1
      %p28 = scmp.ne.s32.totalorder %s23, %s25
      %p29 = scmp.eq.s32.totalorder %s15, 0
      %p30 = por %p28, %p29
      %p31 = scmp.ne.s32.totalorder %s23, %s25
      %p32 = scmp.eq.s32.totalorder %s20, 1
      %p33 = por %p31, %p32
      %p34 = scmp.ne.s32.totalorder %s25, %s26
      %p35 = scmp.eq.s32.totalorder %s20, 0
      %p36 = por %p34, %p35
      %p37 = scmp.ne.s32.totalorder %s25, %s26
      %p38 = scmp.eq.s32.totalorder %s21, 1
      %p39 = por %p37, %p38
      %p41 = scmp.ne.s32.totalorder %s26, %s40
      %p42 = scmp.eq.s32.totalorder %s21, 0
      %p43 = por %p41, %p42
      %s44 = ssub.s32 %s15, %s22
      %p45 = scmp.eq.s32.totalorder %s44, 0
      %s47 = sadd.s32 %s46, 1
      %s48 = scalar_select %p45, %s46, %s47
      %p51 = pneg %p45
      %p52 = scmp.eq.s32.totalorder %s15, 1
      %p53 = por %p51, %p52
      %p54 = scmp.ne.s32.totalorder %s46, %s49
      %p55 = scmp.eq.s32.totalorder %s15, 0
      %p56 = por %p54, %p55
      %p57 = scmp.ne.s32.totalorder %s46, %s49
      %p58 = scmp.eq.s32.totalorder %s20, 1
      %p59 = por %p57, %p58
      %p60 = scmp.ne.s32.totalorder %s49, %s50
      %p61 = scmp.eq.s32.totalorder %s20, 0
      %p62 = por %p60, %p61
      %p63 = scmp.ne.s32.totalorder %s49, %s50
      %p64 = scmp.eq.s32.totalorder %s21, 1
      %p65 = por %p63, %p64
      %p67 = scmp.ne.s32.totalorder %s50, %s66
      %p68 = scmp.eq.s32.totalorder %s21, 0
      %p69 = por %p67, %p68
      %s70 = ssub.s32 %s15, %s22
      %p71 = scmp.eq.s32.totalorder %s70, 0
      %s73 = sadd.s32 %s72, 1
      %s74 = scalar_select %p71, %s72, %s73
      %p77 = pneg %p71
      %p78 = scmp.eq.s32.totalorder %s15, 1
      %p79 = por %p77, %p78
      %p80 = scmp.ne.s32.totalorder %s72, %s75
      %p81 = scmp.eq.s32.totalorder %s15, 0
      %p82 = por %p80, %p81
      %p83 = scmp.ne.s32.totalorder %s72, %s75
      %p84 = scmp.eq.s32.totalorder %s20, 1
      %p85 = por %p83, %p84
      %p86 = scmp.ne.s32.totalorder %s75, %s76
      %p87 = scmp.eq.s32.totalorder %s20, 0
      %p88 = por %p86, %p87
      %p89 = scmp.ne.s32.totalorder %s75, %s76
      %p90 = scmp.eq.s32.totalorder %s21, 1
      %p91 = por %p89, %p90
      %p93 = scmp.ne.s32.totalorder %s76, %s92
      %p94 = scmp.eq.s32.totalorder %s21, 0
      %p95 = por %p93, %p94
      %p96 = scmp.le.s32.totalorder 1, %s15
      %p97 = scmp.lt.s32.totalorder %s15, 3
      %p98 = pnand %p96, %p97
      %p99 = pneg %p98
      // Predicated region
      $region9: #{tpu_custom_call.1} parent=5 // pred_check
        _
      $region10: #{tpu_custom_call.1} parent=5 // pred_check_branch
        %101 = sbr.rel (%p98) target = $region12
      $region11: #{tpu_custom_call.1} parent=5 // pred_region
        %s102 = ssub.s32 %s15, 1
        // Predicated region
        $region13: #{tpu_custom_call.1} parent=11 // pred_check
          %p103 = pneg %p36
        $region14: #{tpu_custom_call.1} parent=11 // pred_check_branch
          %105 = sbr.rel (%p103) target = $region16
        $region15: #{tpu_custom_call.1} parent=11 // pred_region
          _
        $region16: #{tpu_custom_call.1} parent=11 // pred_fallthru
          _
      $region12: #{tpu_custom_call.1} parent=5 // pred_fallthru
        _
      %p106 = scmp.lt.s32.totalorder %s15, 2
      // Predicated region
      $region17: #{tpu_custom_call.1} parent=5 // pred_check
        %p107 = pneg %p106
      $region18: #{tpu_custom_call.1} parent=5 // pred_check_branch
        %109 = sbr.rel (%p107) target = $region20
      $region19: #{tpu_custom_call.1} parent=5 // pred_region
        // Predicated region
        $region21: #{tpu_custom_call.1} parent=19 // pred_check
          %p110 = pneg %p56
        $region22: #{tpu_custom_call.1} parent=19 // pred_check_branch
          %112 = sbr.rel (%p110) target = $region24
        $region23: #{tpu_custom_call.1} parent=19 // pred_region
          %s113 = sand.u32 %s46, 1
          %s114 = scalar_lea.sflag [#allocation4], %s113
          %s115 = sand.u32 %s46, 1
          %s116 = smul.addr %s115, 16
          %s117 = scalar_lea.vmem [#allocation3], %s116
          %119 = vsyncadd %s114, 0
          %s120 = smul.addr %s15, 8
          %s121 = scalar_lea.hbm %s1, %s120
          %s122 = sshll.u32 %s121, 4
          %s123 = int_to_ptr.hbm [resolvable:$true] %s122
          %s124 = sshll.u32 %s117, 4
          %s125 = int_to_ptr.vmem [resolvable:$true] %s124
          %130 = dma.hbm_to_vmem [thread:$0]  %s123, 256, %s125, %s114, 256, 128, 8
        $region24: #{tpu_custom_call.1} parent=19 // pred_fallthru
          _
      $region20: #{tpu_custom_call.1} parent=5 // pred_fallthru
        _
      %p131 = scmp.le.s32.totalorder 1, %s15
      %p132 = scmp.lt.s32.totalorder %s15, 3
      %p133 = pnand %p131, %p132
      %p134 = pneg %p133
      // Predicated region
      $region25: #{tpu_custom_call.1} parent=5 // pred_check
        _
      $region26: #{tpu_custom_call.1} parent=5 // pred_check_branch
        %136 = sbr.rel (%p133) target = $region28
      $region27: #{tpu_custom_call.1} parent=5 // pred_region
        %s137 = ssub.s32 %s15, 1
        %s138 = sand.u32 %s49, 1
        %s139 = scalar_lea.sflag [#allocation4], %s138
        %s140 = sand.u32 %s49, 1
        %s141 = smul.addr %s140, 16
        %s142 = scalar_lea.vmem [#allocation3], %s141
        // Predicated region
        $region29: #{tpu_custom_call.1} parent=27 // pred_check
          %p143 = pneg %p62
        $region30: #{tpu_custom_call.1} parent=27 // pred_check_branch
          %145 = sbr.rel (%p143) target = $region32
        $region31: #{tpu_custom_call.1} parent=27 // pred_region
          %147 = dma.done %s139, 256
        $region32: #{tpu_custom_call.1} parent=27 // pred_fallthru
          _
        %p148 = pneg %p36
        %p149 = pneg %p33
        %s150 = sand.u32 %s49, 1
        %s151 = scalar_lea.sflag [#allocation4], %s150
        %s152 = sand.u32 %s49, 1
        %s153 = smul.addr %s152, 16
        %s154 = scalar_lea.vmem [#allocation3], %s153
        %p155 = pneg %p62
        %p156 = pneg %p59
        %p157 = pneg %p88
        %p158 = pneg %p85
        %s159 = sand.u32 %s75, 1
        %s160 = scalar_lea.sflag [#allocation5], %s159
        %s161 = sand.u32 %s75, 1
        %s162 = smul.addr %s161, 16
        %s163 = scalar_lea.vmem [#allocation6], %s162
        %s164 = sld [smem:[#allocation2]]
        %v165 = vld [vmem:[%s142] sm:$0xff]
        %s166 = scalar_lea.vmem %s142, 8 [#allocation3]
        %v167 = vld [vmem:[%s166] sm:$0xff]
        %v168 = vmul.f32 %v165, %v165
        %v169 = vmul.f32 %v167, %v167
        %v170 = vadd.f32 %v168, %v169
        %v171 = vstv %s164
        %v172 = vsub.f32 %v170, %v171
        %v173 = vmul.f32 %v172, 10.0
        %v174 = vxor.u32 %v173, 2147483648
        %v175 = vmul.f32 %v174, 1.442695
        %v176 = vpow.pop %v175
        %v177 = vadd.f32 %v176, 1.0
        %v178 = vrcp.pop %v177
        %v179 = vmul.f32 %v177, %v178
        %v180 = vsub.f32 1.0, %v179
        %v181 = vmul.f32 %v178, %v180
        %v182 = vadd.f32 %v178, %v181
        %vm183 = vweird.f32 %v177
        %vm184 = vweird.f32 %v178
        %vm185 = vmor %vm183, %vm184
        %v186 = vsel %vm185, %v178, %v182
        %v187 = vand.u32 2147483647, %v177
        %vm188 = vcmp.eq.f32.partialorder %v187, 8.507059e+37
        %v189 = vand.u32 %v177, 2147483648
        %v190 = vor.u32 1.1754944e-38, %v189
        %v191 = vsel %vm188, %v190, %v186
        %v192 = vmul.f32 1.0, %v191
        %v193 = vmul.f32 %v165, %v192
        %194 = vst [vmem:[%s163] sm:$0xff] %v193
        %v195 = vmul.f32 %v167, %v192
        %s196 = scalar_lea.vmem %s163, 8 [#allocation6]
        %197 = vst [vmem:[%s196] sm:$0xff] %v195
        %s198 = sand.u32 %s75, 1
        %s199 = scalar_lea.sflag [#allocation5], %s198
        %s200 = sand.u32 %s75, 1
        %s201 = smul.addr %s200, 16
        %s202 = scalar_lea.vmem [#allocation6], %s201
        // Predicated region
        $region33: #{tpu_custom_call.1} parent=27 // pred_check
          %p203 = pneg %p85
        $region34: #{tpu_custom_call.1} parent=27 // pred_check_branch
          %205 = sbr.rel (%p203) target = $region36
        $region35: #{tpu_custom_call.1} parent=27 // pred_region
          %207 = vsyncadd %s199, 0
          %s208 = smul.addr %s20, 8
          %s209 = scalar_lea.hbm %s2, %s208
          %s210 = sshll.u32 %s202, 4
          %s211 = int_to_ptr.vmem [resolvable:$true] %s210
          %s212 = sshll.u32 %s209, 4
          %s213 = int_to_ptr.hbm [resolvable:$true] %s212
          %218 = dma.vmem_to_hbm [thread:$0]  %s211, 256, %s213, %s199, 128, 256, 8
        $region36: #{tpu_custom_call.1} parent=27 // pred_fallthru
          _
      $region28: #{tpu_custom_call.1} parent=5 // pred_fallthru
        _
      %p219 = scmp.le.s32.totalorder 2, %s15
      // Predicated region
      $region37: #{tpu_custom_call.1} parent=5 // pred_check
        %p220 = pneg %p219
      $region38: #{tpu_custom_call.1} parent=5 // pred_check_branch
        %222 = sbr.rel (%p220) target = $region40
      $region39: #{tpu_custom_call.1} parent=5 // pred_region
        %s223 = ssub.s32 %s15, 2
        // Predicated region
        $region41: #{tpu_custom_call.1} parent=39 // pred_check
          %p224 = pneg %p91
        $region42: #{tpu_custom_call.1} parent=39 // pred_check_branch
          %226 = sbr.rel (%p224) target = $region44
        $region43: #{tpu_custom_call.1} parent=39 // pred_region
          %s227 = sand.u32 %s76, 1
          %s228 = scalar_lea.sflag [#allocation5], %s227
          %s229 = sand.u32 %s76, 1
          %s230 = smul.addr %s229, 16
          %s231 = scalar_lea.vmem [#allocation6], %s230
          %233 = dma.done %s228, 256
        $region44: #{tpu_custom_call.1} parent=39 // pred_fallthru
          _
      $region40: #{tpu_custom_call.1} parent=5 // pred_fallthru
        _
    $region6: #{tpu_custom_call.1} parent=1 // loop_footer
      %s19 = sadd.s32 1, %s15
    $region7: #{tpu_custom_call.1} parent=1 // loop_footer_branch
      %14 = sbr.rel target = $region3
    $region8: #{tpu_custom_call.1} parent=1 // loop_exit
      _
    %234 = vsyncpa [#allocation4], 1
    %s235 = scalar_lea.sflag [#allocation4], 1
    %236 = vsyncpa %s235, 1
    %237 = vsyncpa [#allocation5], 1
    %s238 = scalar_lea.sflag [#allocation5], 1
    %239 = vsyncpa %s238, 1

</llo_original>
